<compile_context>
chip_gen: v6e
topology: v6e:2x2x1
jax: 0.10.0
libtpu: 0.0.40
codegen_flags: <defaults>
</compile_context>

<pallas_src>
import jax
import jax.numpy as jnp
from jax.experimental import pallas as pl
from jax.experimental.pallas import tpu as pltpu


H_DIM = 32                      # stand-in "BERT" hidden size
U_DIM = 11                      # user-embedding dim (module hard-codes +11)
NUM_LABELS = 3
K_DIM = H_DIM + U_DIM + 1       # tok | usr | constant-1 bias column  -> 44
L_PAD = 128                     # lane-dense padded label dim (unmasked vst)
B_PAD = 8                       # sublane-dense padded batch for the output tile


# ----------------------------------------------------------------------------
# Fused kernel: HBM row gathers + mask + tanh + concat(+bias lane) + matmul.
# ----------------------------------------------------------------------------
def fused_classifier_kernel(cls_ids_ref, uids_ref, cls_mask_ref,   # SMEM [B] i32
                            tok_tab_ref, usr_tab_ref,              # HBM (pl.ANY)
                            w_ref,                                 # VMEM [K, L_PAD]
                            out_ref,                               # VMEM [B_PAD, L_PAD]
                            tok_buf, usr_buf, sem):                # scratch
    B = cls_ids_ref.shape[0]
    H = tok_tab_ref.shape[1]
    U = usr_tab_ref.shape[1]
    vocab = tok_tab_ref.shape[0]
    n_users = usr_tab_ref.shape[0]
    B_pad = out_ref.shape[0]

    # 1. Hoist every SMEM scalar read before any DMA / vector work.  Ids are
    #    clamped: HBM/VMEM refs have no bounds checking, an OOB id would
    #    silently read a neighbouring row.
    tids = [jnp.clip(cls_ids_ref[b], 0, vocab - 1) for b in range(B)]
    uid_l = [jnp.clip(uids_ref[b], 0, n_users - 1) for b in range(B)]
    mask_l = [cls_mask_ref[b].astype(jnp.float32) for b in range(B)]

    # 2. Row gathers: DMA exactly B rows of each table HBM -> VMEM scratch.
    #    B is tiny and static -> fully unrolled; start all copies, then wait.
    copies = []
    for b in range(B):
        tc = pltpu.make_async_copy(tok_tab_ref.at[pl.ds(tids[b], 1), :],
                                   tok_buf.at[pl.ds(b, 1), :],
                                   sem.at[0, b])
        uc = pltpu.make_async_copy(usr_tab_ref.at[pl.ds(uid_l[b], 1), :],
                                   usr_buf.at[pl.ds(b, 1), :],
                                   sem.at[1, b])
        tc.start()
        uc.start()
        copies += [tc, uc]
    for c in copies:
        c.wait()

    # 3. Build the matmul LHS entirely in vregs (no scratch round-trip, no
    #    masked lane-offset stores).  Rows >= B hold uninitialized scratch
    #    data; they only affect output rows the wrapper slices away.
    row = jax.lax.broadcasted_iota(jnp.int32, (B_pad, 1), 0)
    mask = jnp.zeros((B_pad, 1), jnp.float32)
    for b in range(B):
        mask = jnp.where(row == b, mask_l[b], mask)

    tok = jnp.tanh(tok_buf[...] * mask)          # stand-in BERT CLS emb [B_pad, H]
    usr = usr_buf[...]                           # user embeddings       [B_pad, U]
    ones = jnp.ones((B_pad, 1), jnp.float32)     # drives the bias row of w_ref
    x = jnp.concatenate([tok, usr, ones], axis=-1)          # [B_pad, K_DIM]

    # 4. Single merged lane-dense MXU matmul; bias folded into w_ref's last row.
    out_ref[...] = jnp.dot(x, w_ref[...], preferred_element_type=jnp.float32)


def acaris_classifier(cls_ids, uids, cls_mask, token_table, user_table, w_full,
                      num_labels=NUM_LABELS):
    """cls_ids/uids/cls_mask [B] int32; tables stay in HBM; w_full [K, L_PAD]."""
    B = cls_ids.shape[0]
    H = token_table.shape[1]
    U = user_table.shape[1]
    K, L_pad = w_full.shape
    assert K == H + U + 1
    b_pad = max(B_PAD, pl.cdiv(B, 8) * 8)        # full-sublane output tile

    out = pl.pallas_call(
        fused_classifier_kernel,
        out_shape=jax.ShapeDtypeStruct((b_pad, L_pad), jnp.float32),
        in_specs=[
            pl.BlockSpec(memory_space=pltpu.MemorySpace.SMEM),   # cls_ids
            pl.BlockSpec(memory_space=pltpu.MemorySpace.SMEM),   # uids
            pl.BlockSpec(memory_space=pltpu.MemorySpace.SMEM),   # cls mask column
            pl.BlockSpec(memory_space=pl.ANY),                   # token table (HBM)
            pl.BlockSpec(memory_space=pl.ANY),                   # user table (HBM)
            pl.BlockSpec(memory_space=pltpu.MemorySpace.VMEM),   # merged weight+bias
        ],
        out_specs=pl.BlockSpec(memory_space=pltpu.MemorySpace.VMEM),
        scratch_shapes=[
            pltpu.VMEM((b_pad, H), jnp.float32),     # gathered CLS token rows
            pltpu.VMEM((b_pad, U), jnp.float32),     # gathered user rows
            pltpu.SemaphoreType.DMA((2, B)),         # one sem per row DMA
        ],
        # TODO(synk): for large B, add grid=(num_batch_tiles,) and
        # compiler_params=pltpu.CompilerParams(dimension_semantics=("parallel",))
        # so v7x's two TensorCores split the batch; at B=2 a grid only adds
        # per-step overhead.
    )(cls_ids, uids, cls_mask, token_table, user_table, w_full)
    return out[:B, :num_labels]                   # drop sublane + lane padding


# ----------------------------------------------------------------------------
# Forward (glue).
# ----------------------------------------------------------------------------
def acaris_forward(input_ids, attention_mask, uids, params):
    # TODO(synk): the pretrained BERT encoder (AutoModel) and ACARISUserEmbedder
    # are external submodules; they are replaced by deterministic stand-ins
    # (CLS-token embedding lookup * mask -> tanh, and a user embedding table).
    cls_ids = input_ids[:, 0].astype(jnp.int32)    # only the CLS row is needed
    cls_mask = attention_mask[:, 0].astype(jnp.int32)
    logits = acaris_classifier(cls_ids, uids.astype(jnp.int32), cls_mask,
                               params["token_table"], params["user_table"],
                               params["w_full"])
    return {"logits": logits}


def build_params(key, vocab, n_users, h=H_DIM, u=U_DIM, l=NUM_LABELS):
    k1, k2, k3, k4, k5 = jax.random.split(key, 5)
    token_table = jax.random.normal(k1, (vocab, h), jnp.float32) * 0.1
    user_table = jax.random.normal(k2, (n_users, u), jnp.float32) * 0.1
    # nn.Linear(h + u, l): weight [l, h+u], bias [l] -> transposed & split here.
    w_tok = jax.random.normal(k3, (h, l), jnp.float32) * 0.05
    w_usr = jax.random.normal(k4, (u, l), jnp.float32) * 0.05
    bias = jax.random.normal(k5, (l,), jnp.float32) * 0.01
    # Merged, zero-padded, lane-dense classifier weight with the bias baked into
    # row (h + u), driven by the constant 1.0 column the kernel appends.
    w_full = jnp.zeros((h + u + 1, L_PAD), jnp.float32)
    w_full = w_full.at[:h, :l].set(w_tok)
    w_full = w_full.at[h:h + u, :l].set(w_usr)
    w_full = w_full.at[h + u, :l].set(bias)
    params = {"token_table": token_table, "user_table": user_table, "w_full": w_full}
    raw = {"w_tok": w_tok, "w_usr": w_usr, "bias": bias}
    return params, raw


# ----------------------------------------------------------------------------
# Main
# ----------------------------------------------------------------------------
if __name__ == "__main__":
    B, S = 2, 8
    VOCAB, N_USERS = 100, 16

    key = jax.random.PRNGKey(0)
    kp, ki = jax.random.split(key, 2)
    params, raw = build_params(kp, VOCAB, N_USERS)

    input_ids = jax.random.randint(ki, (B, S), 0, VOCAB, dtype=jnp.int32)
    attention_mask = jnp.ones((B, S), dtype=jnp.int32)
    uids = jnp.array([3, 7], dtype=jnp.int32)

    out = acaris_forward(input_ids, attention_mask, uids, params)
    logits = jax.block_until_ready(out["logits"])

    # Plain-JAX reference (same stand-in math: CLS lookup * mask -> tanh,
    # user lookup, concat, dense classifier).
    tok = jnp.tanh(params["token_table"][input_ids[:, 0]]
                   * attention_mask[:, 0:1].astype(jnp.float32))
    usr = params["user_table"][uids]
    w_cat = jnp.concatenate([raw["w_tok"], raw["w_usr"]], axis=0)
    ref = jnp.concatenate([tok, usr], axis=-1) @ w_cat + raw["bias"][None, :]

    assert logits.shape == (B, NUM_LABELS)
    assert jnp.allclose(logits, ref, atol=2e-5), "mismatch vs reference"

    print("KERNEL_OK")
</pallas_src>

<mosaic_0001>
module attributes {stable_mosaic.version = 11 : i64} {
  func.func @fused_classifier_kernel(%arg0: memref<2xi32, #tpu.memory_space<smem>>, %arg1: memref<2xi32, #tpu.memory_space<smem>>, %arg2: memref<2xi32, #tpu.memory_space<smem>>, %arg3: memref<100x32xf32, #tpu.memory_space<any>>, %arg4: memref<16x11xf32, #tpu.memory_space<any>>, %arg5: memref<44x128xf32, #tpu.memory_space<vmem>>, %arg6: memref<8x128xf32, #tpu.memory_space<vmem>>, %arg7: memref<8x32xf32, #tpu.memory_space<vmem>>, %arg8: memref<8x11xf32, #tpu.memory_space<vmem>>, %arg9: memref<2x2x!tpu.dma_semaphore, #tpu.memory_space<semaphore_mem>>) attributes {dimension_semantics = [], scalar_prefetch = 0 : i64, scratch_operands = 3 : i64, tpu.core_type = #tpu.core_type<tc>} {
    %c0 = arith.constant 0 : index
    %0 = memref.load %arg0[%c0] : memref<2xi32, #tpu.memory_space<smem>>
    %c0_i32 = arith.constant 0 : i32
    %c99_i32 = arith.constant 99 : i32
    %1 = arith.maxsi %c0_i32, %0 : i32
    %2 = arith.minsi %c99_i32, %1 : i32
    %c1 = arith.constant 1 : index
    %3 = memref.load %arg0[%c1] : memref<2xi32, #tpu.memory_space<smem>>
    %c0_i32_0 = arith.constant 0 : i32
    %c99_i32_1 = arith.constant 99 : i32
    %4 = arith.maxsi %c0_i32_0, %3 : i32
    %5 = arith.minsi %c99_i32_1, %4 : i32
    %c0_2 = arith.constant 0 : index
    %6 = memref.load %arg1[%c0_2] : memref<2xi32, #tpu.memory_space<smem>>
    %c0_i32_3 = arith.constant 0 : i32
    %c15_i32 = arith.constant 15 : i32
    %7 = arith.maxsi %c0_i32_3, %6 : i32
    %8 = arith.minsi %c15_i32, %7 : i32
    %c1_4 = arith.constant 1 : index
    %9 = memref.load %arg1[%c1_4] : memref<2xi32, #tpu.memory_space<smem>>
    %c0_i32_5 = arith.constant 0 : i32
    %c15_i32_6 = arith.constant 15 : i32
    %10 = arith.maxsi %c0_i32_5, %9 : i32
    %11 = arith.minsi %c15_i32_6, %10 : i32
    %c0_7 = arith.constant 0 : index
    %12 = memref.load %arg2[%c0_7] : memref<2xi32, #tpu.memory_space<smem>>
    %13 = arith.sitofp %12 : i32 to f32
    %c1_8 = arith.constant 1 : index
    %14 = memref.load %arg2[%c1_8] : memref<2xi32, #tpu.memory_space<smem>>
    %15 = arith.sitofp %14 : i32 to f32
    %c0_i32_9 = arith.constant 0 : i32
    %c0_i32_10 = arith.constant 0 : i32
    %c0_i32_11 = arith.constant 0 : i32
    %16 = tpu.memref_slice %arg3[%2, %c0_i32_11] : memref<100x32xf32, #tpu.memory_space<any>> -> memref<1x32xf32, #tpu.memory_space<any>>
    %c0_i32_12 = arith.constant 0 : i32
    %c0_i32_13 = arith.constant 0 : i32
    %17 = tpu.memref_slice %arg7[%c0_i32_12, %c0_i32_13] : memref<8x32xf32, #tpu.memory_space<vmem>> -> memref<1x32xf32, #tpu.memory_space<vmem>>
    %18 = tpu.memref_slice %arg9[%c0_i32_9, %c0_i32_10] : memref<2x2x!tpu.dma_semaphore, #tpu.memory_space<semaphore_mem>> -> memref<1x1x!tpu.dma_semaphore, #tpu.memory_space<semaphore_mem>>
    %19 = tpu.memref_squeeze %18 : memref<1x1x!tpu.dma_semaphore, #tpu.memory_space<semaphore_mem>> -> memref<!tpu.dma_semaphore, #tpu.memory_space<semaphore_mem>>
    tpu.enqueue_dma source(%16 : memref<1x32xf32, #tpu.memory_space<any>>) target(%17 : memref<1x32xf32, #tpu.memory_space<vmem>>) target_semaphore(%19 : memref<!tpu.dma_semaphore, #tpu.memory_space<semaphore_mem>>)
    %c1_i32 = arith.constant 1 : i32
    %c0_i32_14 = arith.constant 0 : i32
    %c0_i32_15 = arith.constant 0 : i32
    %20 = tpu.memref_slice %arg4[%8, %c0_i32_15] : memref<16x11xf32, #tpu.memory_space<any>> -> memref<1x11xf32, #tpu.memory_space<any>>
    %c0_i32_16 = arith.constant 0 : i32
    %c0_i32_17 = arith.constant 0 : i32
    %21 = tpu.memref_slice %arg8[%c0_i32_16, %c0_i32_17] : memref<8x11xf32, #tpu.memory_space<vmem>> -> memref<1x11xf32, #tpu.memory_space<vmem>>
    %22 = tpu.memref_slice %arg9[%c1_i32, %c0_i32_14] : memref<2x2x!tpu.dma_semaphore, #tpu.memory_space<semaphore_mem>> -> memref<1x1x!tpu.dma_semaphore, #tpu.memory_space<semaphore_mem>>
    %23 = tpu.memref_squeeze %22 : memref<1x1x!tpu.dma_semaphore, #tpu.memory_space<semaphore_mem>> -> memref<!tpu.dma_semaphore, #tpu.memory_space<semaphore_mem>>
    tpu.enqueue_dma source(%20 : memref<1x11xf32, #tpu.memory_space<any>>) target(%21 : memref<1x11xf32, #tpu.memory_space<vmem>>) target_semaphore(%23 : memref<!tpu.dma_semaphore, #tpu.memory_space<semaphore_mem>>)
    %c0_i32_18 = arith.constant 0 : i32
    %c1_i32_19 = arith.constant 1 : i32
    %c0_i32_20 = arith.constant 0 : i32
    %24 = tpu.memref_slice %arg3[%5, %c0_i32_20] : memref<100x32xf32, #tpu.memory_space<any>> -> memref<1x32xf32, #tpu.memory_space<any>>
    %c1_i32_21 = arith.constant 1 : i32
    %c0_i32_22 = arith.constant 0 : i32
    %25 = tpu.memref_slice %arg7[%c1_i32_21, %c0_i32_22] : memref<8x32xf32, #tpu.memory_space<vmem>> -> memref<1x32xf32, #tpu.memory_space<vmem>>
    %26 = tpu.memref_slice %arg9[%c0_i32_18, %c1_i32_19] : memref<2x2x!tpu.dma_semaphore, #tpu.memory_space<semaphore_mem>> -> memref<1x1x!tpu.dma_semaphore, #tpu.memory_space<semaphore_mem>>
    %27 = tpu.memref_squeeze %26 : memref<1x1x!tpu.dma_semaphore, #tpu.memory_space<semaphore_mem>> -> memref<!tpu.dma_semaphore, #tpu.memory_space<semaphore_mem>>
    tpu.enqueue_dma source(%24 : memref<1x32xf32, #tpu.memory_space<any>>) target(%25 : memref<1x32xf32, #tpu.memory_space<vmem>>) target_semaphore(%27 : memref<!tpu.dma_semaphore, #tpu.memory_space<semaphore_mem>>)
    %c1_i32_23 = arith.constant 1 : i32
    %c1_i32_24 = arith.constant 1 : i32
    %c0_i32_25 = arith.constant 0 : i32
    %28 = tpu.memref_slice %arg4[%11, %c0_i32_25] : memref<16x11xf32, #tpu.memory_space<any>> -> memref<1x11xf32, #tpu.memory_space<any>>
    %c1_i32_26 = arith.constant 1 : i32
    %c0_i32_27 = arith.constant 0 : i32
    %29 = tpu.memref_slice %arg8[%c1_i32_26, %c0_i32_27] : memref<8x11xf32, #tpu.memory_space<vmem>> -> memref<1x11xf32, #tpu.memory_space<vmem>>
    %30 = tpu.memref_slice %arg9[%c1_i32_23, %c1_i32_24] : memref<2x2x!tpu.dma_semaphore, #tpu.memory_space<semaphore_mem>> -> memref<1x1x!tpu.dma_semaphore, #tpu.memory_space<semaphore_mem>>
    %31 = tpu.memref_squeeze %30 : memref<1x1x!tpu.dma_semaphore, #tpu.memory_space<semaphore_mem>> -> memref<!tpu.dma_semaphore, #tpu.memory_space<semaphore_mem>>
    tpu.enqueue_dma source(%28 : memref<1x11xf32, #tpu.memory_space<any>>) target(%29 : memref<1x11xf32, #tpu.memory_space<vmem>>) target_semaphore(%31 : memref<!tpu.dma_semaphore, #tpu.memory_space<semaphore_mem>>)
    %c0_i32_28 = arith.constant 0 : i32
    %c0_i32_29 = arith.constant 0 : i32
    %c0_i32_30 = arith.constant 0 : i32
    %32 = tpu.memref_slice %arg3[%2, %c0_i32_30] : memref<100x32xf32, #tpu.memory_space<any>> -> memref<1x32xf32, #tpu.memory_space<any>>
    %c0_i32_31 = arith.constant 0 : i32
    %c0_i32_32 = arith.constant 0 : i32
    %33 = tpu.memref_slice %arg7[%c0_i32_31, %c0_i32_32] : memref<8x32xf32, #tpu.memory_space<vmem>> -> memref<1x32xf32, #tpu.memory_space<vmem>>
    %34 = tpu.memref_slice %arg9[%c0_i32_28, %c0_i32_29] : memref<2x2x!tpu.dma_semaphore, #tpu.memory_space<semaphore_mem>> -> memref<1x1x!tpu.dma_semaphore, #tpu.memory_space<semaphore_mem>>
    %35 = tpu.memref_squeeze %34 : memref<1x1x!tpu.dma_semaphore, #tpu.memory_space<semaphore_mem>> -> memref<!tpu.dma_semaphore, #tpu.memory_space<semaphore_mem>>
    tpu.wait_dma2 semaphore(%35 : memref<!tpu.dma_semaphore, #tpu.memory_space<semaphore_mem>>) src(%32 : memref<1x32xf32, #tpu.memory_space<any>>) dst(%33 : memref<1x32xf32, #tpu.memory_space<vmem>>)
    %c1_i32_33 = arith.constant 1 : i32
    %c0_i32_34 = arith.constant 0 : i32
    %c0_i32_35 = arith.constant 0 : i32
    %36 = tpu.memref_slice %arg4[%8, %c0_i32_35] : memref<16x11xf32, #tpu.memory_space<any>> -> memref<1x11xf32, #tpu.memory_space<any>>
    %c0_i32_36 = arith.constant 0 : i32
    %c0_i32_37 = arith.constant 0 : i32
    %37 = tpu.memref_slice %arg8[%c0_i32_36, %c0_i32_37] : memref<8x11xf32, #tpu.memory_space<vmem>> -> memref<1x11xf32, #tpu.memory_space<vmem>>
    %38 = tpu.memref_slice %arg9[%c1_i32_33, %c0_i32_34] : memref<2x2x!tpu.dma_semaphore, #tpu.memory_space<semaphore_mem>> -> memref<1x1x!tpu.dma_semaphore, #tpu.memory_space<semaphore_mem>>
    %39 = tpu.memref_squeeze %38 : memref<1x1x!tpu.dma_semaphore, #tpu.memory_space<semaphore_mem>> -> memref<!tpu.dma_semaphore, #tpu.memory_space<semaphore_mem>>
    tpu.wait_dma2 semaphore(%39 : memref<!tpu.dma_semaphore, #tpu.memory_space<semaphore_mem>>) src(%36 : memref<1x11xf32, #tpu.memory_space<any>>) dst(%37 : memref<1x11xf32, #tpu.memory_space<vmem>>)
    %c0_i32_38 = arith.constant 0 : i32
    %c1_i32_39 = arith.constant 1 : i32
    %c0_i32_40 = arith.constant 0 : i32
    %40 = tpu.memref_slice %arg3[%5, %c0_i32_40] : memref<100x32xf32, #tpu.memory_space<any>> -> memref<1x32xf32, #tpu.memory_space<any>>
    %c1_i32_41 = arith.constant 1 : i32
    %c0_i32_42 = arith.constant 0 : i32
    %41 = tpu.memref_slice %arg7[%c1_i32_41, %c0_i32_42] : memref<8x32xf32, #tpu.memory_space<vmem>> -> memref<1x32xf32, #tpu.memory_space<vmem>>
    %42 = tpu.memref_slice %arg9[%c0_i32_38, %c1_i32_39] : memref<2x2x!tpu.dma_semaphore, #tpu.memory_space<semaphore_mem>> -> memref<1x1x!tpu.dma_semaphore, #tpu.memory_space<semaphore_mem>>
    %43 = tpu.memref_squeeze %42 : memref<1x1x!tpu.dma_semaphore, #tpu.memory_space<semaphore_mem>> -> memref<!tpu.dma_semaphore, #tpu.memory_space<semaphore_mem>>
    tpu.wait_dma2 semaphore(%43 : memref<!tpu.dma_semaphore, #tpu.memory_space<semaphore_mem>>) src(%40 : memref<1x32xf32, #tpu.memory_space<any>>) dst(%41 : memref<1x32xf32, #tpu.memory_space<vmem>>)
    %c1_i32_43 = arith.constant 1 : i32
    %c1_i32_44 = arith.constant 1 : i32
    %c0_i32_45 = arith.constant 0 : i32
    %44 = tpu.memref_slice %arg4[%11, %c0_i32_45] : memref<16x11xf32, #tpu.memory_space<any>> -> memref<1x11xf32, #tpu.memory_space<any>>
    %c1_i32_46 = arith.constant 1 : i32
    %c0_i32_47 = arith.constant 0 : i32
    %45 = tpu.memref_slice %arg8[%c1_i32_46, %c0_i32_47] : memref<8x11xf32, #tpu.memory_space<vmem>> -> memref<1x11xf32, #tpu.memory_space<vmem>>
    %46 = tpu.memref_slice %arg9[%c1_i32_43, %c1_i32_44] : memref<2x2x!tpu.dma_semaphore, #tpu.memory_space<semaphore_mem>> -> memref<1x1x!tpu.dma_semaphore, #tpu.memory_space<semaphore_mem>>
    %47 = tpu.memref_squeeze %46 : memref<1x1x!tpu.dma_semaphore, #tpu.memory_space<semaphore_mem>> -> memref<!tpu.dma_semaphore, #tpu.memory_space<semaphore_mem>>
    tpu.wait_dma2 semaphore(%47 : memref<!tpu.dma_semaphore, #tpu.memory_space<semaphore_mem>>) src(%44 : memref<1x11xf32, #tpu.memory_space<any>>) dst(%45 : memref<1x11xf32, #tpu.memory_space<vmem>>)
    %48 = tpu.iota {dimensions = array<i32: 0>} : vector<8x1xi32>
    %cst = arith.constant 0.000000e+00 : f32
    %49 = vector.broadcast %cst : f32 to vector<8x1xf32>
    %c0_i32_48 = arith.constant 0 : i32
    %50 = vector.broadcast %c0_i32_48 : i32 to vector<8x1xi32>
    %51 = arith.cmpi eq, %48, %50 : vector<8x1xi32>
    %52 = vector.broadcast %13 : f32 to vector<8x1xf32>
    %53 = arith.select %51, %52, %49 : vector<8x1xi1>, vector<8x1xf32>
    %c1_i32_49 = arith.constant 1 : i32
    %54 = vector.broadcast %c1_i32_49 : i32 to vector<8x1xi32>
    %55 = arith.cmpi eq, %48, %54 : vector<8x1xi32>
    %56 = vector.broadcast %15 : f32 to vector<8x1xf32>
    %57 = arith.select %55, %56, %53 : vector<8x1xi1>, vector<8x1xf32>
    %c0_50 = arith.constant 0 : index
    %c0_51 = arith.constant 0 : index
    %58 = vector.load %arg7[%c0_50, %c0_51] : memref<8x32xf32, #tpu.memory_space<vmem>>, vector<8x32xf32>
    %59 = vector.broadcast %57 : vector<8x1xf32> to vector<8x32xf32>
    %60 = arith.mulf %58, %59 : vector<8x32xf32>
    %61 = math.tanh %60 : vector<8x32xf32>
    %c0_52 = arith.constant 0 : index
    %c0_53 = arith.constant 0 : index
    %62 = vector.load %arg8[%c0_52, %c0_53] : memref<8x11xf32, #tpu.memory_space<vmem>>, vector<8x11xf32>
    %cst_54 = arith.constant 1.000000e+00 : f32
    %63 = vector.broadcast %cst_54 : f32 to vector<8x1xf32>
    %64 = tpu.concatenate %61, %62, %63 in 1 : vector<8x32xf32>, vector<8x11xf32>, vector<8x1xf32> -> vector<8x44xf32>
    %c0_55 = arith.constant 0 : index
    %c0_56 = arith.constant 0 : index
    %65 = vector.load %arg5[%c0_55, %c0_56] : memref<44x128xf32, #tpu.memory_space<vmem>>, vector<44x128xf32>
    %cst_57 = arith.constant dense<0.000000e+00> : vector<8x128xf32>
    %66 = tpu.matmul %64, %65, %cst_57 {dimension_numbers = #tpu.dot_dimension_numbers<[1], [0], [0], [1], [0, 0, 1, 1], [], []>} : vector<8x44xf32>, vector<44x128xf32>, vector<8x128xf32> -> vector<8x128xf32>
    %c0_58 = arith.constant 0 : index
    %c0_59 = arith.constant 0 : index
    %67 = vector.load %arg6[%c0_58, %c0_59] : memref<8x128xf32, #tpu.memory_space<vmem>>, vector<8x128xf32>
    tpu.vector_store %arg6[%c0_58, %c0_59], %66 {strides = array<i32>} : memref<8x128xf32, #tpu.memory_space<vmem>>, vector<8x128xf32>,
    return
  }
}

</mosaic_0001>

<llo_original>
// kernel: tpu_custom_call.1
$region0: #{tpu_custom_call.1}
  #allocation0 [shape = 'u32[]', space=smem, size = 0x4, offset = 0x4, fixed_abs, tag = 'smem constant byte address 0x4 - core index']
  #allocation1 [shape = 'u32[144,128]{1,0:T(1,128)}', space=vmem, size = 0x12000, scoped, tag = 'internal scratch']
  #allocation2 [shape = 'f32[8,32]{1,0:T(8,128)}', space=vmem, size = 0x1000, scoped, tag = 'scratch operand']
  #allocation3 [shape = 'f32[8,11]{1,0:T(8,128)}', space=vmem, size = 0x1000, scoped, tag = 'scratch operand']
  #allocation4 [shape = 's32[4]{0}', space=sflag, size = 0x10, scoped, tag = 'scratch operand']
  #allocation12 [shape = 's32[]', space=sflag, size = 0x4, offset = 0, fixed_abs, tag = 'sflag constant byte address 0x0 - dummy sync flag']
  #allocation13 [shape = 's32[]', space=sflag, size = 0x4, offset = 0, fixed_abs, tag = 'sflag constant byte address 0x0 - dummy sync flag']
  #allocation14 [shape = 's32[]', space=sflag, size = 0x4, offset = 0, fixed_abs, tag = 'sflag constant byte address 0x0 - dummy sync flag']
  #allocation15 [shape = 's32[]', space=sflag, size = 0x4, offset = 0, fixed_abs, tag = 'sflag constant byte address 0x0 - dummy sync flag']
  %s0 = inlined_call_operand.vmem [shape: s32[2], index: 0, kind: input, shape index: {}]
  %s1 = inlined_call_operand.vmem [shape: s32[2], index: 1, kind: input, shape index: {}]
  %s2 = inlined_call_operand.vmem [shape: s32[2], index: 2, kind: input, shape index: {}]
  %s3 = inlined_call_operand.vmem [shape: f32[100,32], index: 3, kind: input, shape index: {}]
  %s4 = inlined_call_operand.vmem [shape: f32[16,11], index: 4, kind: input, shape index: {}]
  %s5 = inlined_call_operand.vmem [shape: f32[44,128], index: 5, kind: input, shape index: {}]
  %s6 = inlined_call_operand.hbm [shape: f32[8,128], index: 6, kind: output, shape index: {}]
  %s7 = sld [smem:[#allocation0]]
  $region158: #{tpu_custom_call.1} parent=0
    _
  %s9 = ssub.s32 1, %s7
  %s10 = scalar_select 0, %s9, %s7
  $region1: #{tpu_custom_call.1} parent=0
    #allocation5 [shape = 'u8[512]{0}', space=smem, size = 0x200, scoped, tag = 'input window, operand 0, single buffered']
    #allocation6 [shape = 's32[1]{0}', space=sflag, size = 0x4, scoped, tag = 'scoped memory for tpu_custom_call.1']
    #allocation7 [shape = 's32[1]{0}', space=sflag, size = 0x4, scoped, tag = 'scoped memory for tpu_custom_call.1']
    #allocation8 [shape = 'u8[512]{0}', space=smem, size = 0x200, scoped, tag = 'input window, operand 1, single buffered']
    #allocation9 [shape = 's32[1]{0}', space=sflag, size = 0x4, scoped, tag = 'scoped memory for tpu_custom_call.1']
    #allocation10 [shape = 'u8[512]{0}', space=smem, size = 0x200, scoped, tag = 'input window, operand 2, single buffered']
    #allocation11 [shape = 'u8[4096]{0}', space=vmem, size = 0x1000, scoped, tag = 'output window, operand 0, single buffered']
    %11 = vsyncpa [#allocation7], 0
    %12 = vsyncpa [#allocation9], 0
    %13 = vsyncpa [#allocation6], 0
    // Predicated region
    $region2: #{tpu_custom_call.1} parent=1 // pred_check
      _
    $region3: #{tpu_custom_call.1} parent=1 // pred_check_branch
      %15 = sbr.rel (0) target = $region5
    $region4: #{tpu_custom_call.1} parent=1 // pred_region
      %s17 = ssub.s32 16, 16
      %18 = vsyncadd [#allocation7], %s17
      %s20 = sshll.u32 %s0, 4
      %s21 = int_to_ptr.vmem [resolvable:$true] %s20
      %23 = dma.vmem_to_smem %s21, 16, [#allocation5], [#allocation7]
    $region5: #{tpu_custom_call.1} parent=1 // pred_fallthru
      _
    // Predicated region
    $region6: #{tpu_custom_call.1} parent=1 // pred_check
      _
    $region7: #{tpu_custom_call.1} parent=1 // pred_check_branch
      %25 = sbr.rel (0) target = $region9
    $region8: #{tpu_custom_call.1} parent=1 // pred_region
      %s27 = ssub.s32 16, 16
      %28 = vsyncadd [#allocation9], %s27
      %s30 = sshll.u32 %s1, 4
      %s31 = int_to_ptr.vmem [resolvable:$true] %s30
      %33 = dma.vmem_to_smem %s31, 16, [#allocation8], [#allocation9]
    $region9: #{tpu_custom_call.1} parent=1 // pred_fallthru
      _
    // Predicated region
    $region10: #{tpu_custom_call.1} parent=1 // pred_check
      _
    $region11: #{tpu_custom_call.1} parent=1 // pred_check_branch
      %35 = sbr.rel (0) target = $region13
    $region12: #{tpu_custom_call.1} parent=1 // pred_region
      %s37 = ssub.s32 16, 16
      %38 = vsyncadd [#allocation9], %s37
      %s40 = sshll.u32 %s2, 4
      %s41 = int_to_ptr.vmem [resolvable:$true] %s40
      %43 = dma.vmem_to_smem %s41, 16, [#allocation10], [#allocation9]
    $region13: #{tpu_custom_call.1} parent=1 // pred_fallthru
      _
    // Predicated region
    $region14: #{tpu_custom_call.1} parent=1 // pred_check
      _
    $region15: #{tpu_custom_call.1} parent=1 // pred_check_branch
      %45 = sbr.rel (0) target = $region17
    $region16: #{tpu_custom_call.1} parent=1 // pred_region
      _
    $region17: #{tpu_custom_call.1} parent=1 // pred_fallthru
      _
    // Predicated region
    $region18: #{tpu_custom_call.1} parent=1 // pred_check
      _
    $region19: #{tpu_custom_call.1} parent=1 // pred_check_branch
      %47 = sbr.rel (0) target = $region21
    $region20: #{tpu_custom_call.1} parent=1 // pred_region
      %48 = dma.done [#allocation7], 16
    $region21: #{tpu_custom_call.1} parent=1 // pred_fallthru
      _
    // Predicated region
    $region22: #{tpu_custom_call.1} parent=1 // pred_check
      _
    $region23: #{tpu_custom_call.1} parent=1 // pred_check_branch
      %50 = sbr.rel (0) target = $region25
    $region24: #{tpu_custom_call.1} parent=1 // pred_region
      %51 = dma.done [#allocation9], 16
    $region25: #{tpu_custom_call.1} parent=1 // pred_fallthru
      _
    // Predicated region
    $region26: #{tpu_custom_call.1} parent=1 // pred_check
      _
    $region27: #{tpu_custom_call.1} parent=1 // pred_check_branch
      %53 = sbr.rel (0) target = $region29
    $region28: #{tpu_custom_call.1} parent=1 // pred_region
      %54 = dma.done [#allocation9], 16
    $region29: #{tpu_custom_call.1} parent=1 // pred_fallthru
      _
    %55 = sfence
    %s56 = sld [smem:[#allocation5]]
    %p57 = scmp.gt.s32.totalorder %s56, 0
    %s58 = scalar_select %p57, %s56, 0
    %p59 = scmp.lt.s32.totalorder %s58, 99
    %s60 = scalar_select %p59, %s58, 99
    %s61 = sld [smem:[#allocation5 + $0x1]]
    %p62 = scmp.gt.s32.totalorder %s61, 0
    %s63 = scalar_select %p62, %s61, 0
    %p64 = scmp.lt.s32.totalorder %s63, 99
    %s65 = scalar_select %p64, %s63, 99
    %s66 = sld [smem:[#allocation8]]
    %p67 = scmp.gt.s32.totalorder %s66, 0
    %s68 = scalar_select %p67, %s66, 0
    %p69 = scmp.lt.s32.totalorder %s68, 15
    %s70 = scalar_select %p69, %s68, 15
    %s71 = sld [smem:[#allocation8 + $0x1]]
    %p72 = scmp.gt.s32.totalorder %s71, 0
    %s73 = scalar_select %p72, %s71, 0
    %p74 = scmp.lt.s32.totalorder %s73, 15
    %s75 = scalar_select %p74, %s73, 15
    %s76 = sld [smem:[#allocation10]]
    %s77 = scvt.s32.f32 %s76
    %s78 = sld [smem:[#allocation10 + $0x1]]
    %s79 = scvt.s32.f32 %s78
    %s80 = scalar_lea.vmem %s3, %s60
    %p82 = scmp.lt.u32.totalorder 1, 8
    %p83 = pneg %p82
    // Predicated region
    $region30: #{tpu_custom_call.1} parent=1 // pred_check
      _
    $region31: #{tpu_custom_call.1} parent=1 // pred_check_branch
      %85 = sbr.rel (%p82) target = $region33
    $region32: #{tpu_custom_call.1} parent=1 // pred_region
      %s101 = sand.u32 1, 7
      %p102 = scmp.eq.s32.totalorder %s101, 0
      %p103 = pneg %p102
      // Predicated region
      $region45: #{tpu_custom_call.1} parent=32 // pred_check
        _
      $region46: #{tpu_custom_call.1} parent=32 // pred_check_branch
        %105 = sbr.rel (%p102) target = $region48
      $region47: #{tpu_custom_call.1} parent=32 // pred_region
        %s106 = sand.u32 1, 7
        %s107 = ssub.s32 1, %s106
        %s108 = scalar_lea.vmem %s80, %s107
        %s109 = ssub.s32 1, %s106
        %s110 = scalar_lea.vmem [#allocation2], %s109
        %s111 = sshll.u32 1, %s106
        %s112 = ssub.s32 %s111, 1
        loop: start=0, step=1, limit=1
        $region49: #{tpu_custom_call.1} parent=47 // loop_pre_header
          _
        $region50: #{tpu_custom_call.1} parent=47 // loop_header
          %s114 = sphi 0, %s118
          %p115 = scmp.ge.s32.totalorder %s114, 1
          %s119 = sphi %s108, %s108
          %s120 = sphi %s110, %s110
        $region51: #{tpu_custom_call.1} parent=47 // loop_header_branch
          %117 = sbr.rel (%p115) target = $region55
        $region52: #{tpu_custom_call.1} parent=47 // loop_body
          %v121 = vld [vmem:[%s119] sm:%s112]
          %122 = vst [vmem:[%s120] sm:%s112] %v121
        $region53: #{tpu_custom_call.1} parent=47 // loop_footer
          %s118 = sadd.s32 1, %s114
        $region54: #{tpu_custom_call.1} parent=47 // loop_footer_branch
          %113 = sbr.rel target = $region50
        $region55: #{tpu_custom_call.1} parent=47 // loop_exit
          _
      $region48: #{tpu_custom_call.1} parent=32 // pred_fallthru
        _
    $region33: #{tpu_custom_call.1} parent=1 // pred_fallthru
      _
    // Predicated region
    $region34: #{tpu_custom_call.1} parent=1 // pred_check
      %p86 = pneg %p82
    $region35: #{tpu_custom_call.1} parent=1 // pred_check_branch
      %88 = sbr.rel (%p86) target = $region37
    $region36: #{tpu_custom_call.1} parent=1 // pred_region
      %s89 = sshll.u32 1, 1
      %s90 = ssub.s32 %s89, 1
      loop: start=0, step=1, limit=1
      $region38: #{tpu_custom_call.1} parent=36 // loop_pre_header
        _
      $region39: #{tpu_custom_call.1} parent=36 // loop_header
        %s92 = sphi 0, %s96
        %p93 = scmp.ge.s32.totalorder %s92, 1
        %s97 = sphi %s80, %s80
        %s98 = sphi [#allocation2], [#allocation2]
      $region40: #{tpu_custom_call.1} parent=36 // loop_header_branch
        %95 = sbr.rel (%p93) target = $region44
      $region41: #{tpu_custom_call.1} parent=36 // loop_body
        %v99 = vld [vmem:[%s97] sm:%s90]
        %100 = vst [vmem:[%s98] sm:%s90] %v99
      $region42: #{tpu_custom_call.1} parent=36 // loop_footer
        %s96 = sadd.s32 1, %s92
      $region43: #{tpu_custom_call.1} parent=36 // loop_footer_branch
        %91 = sbr.rel target = $region39
      $region44: #{tpu_custom_call.1} parent=36 // loop_exit
        _
    $region37: #{tpu_custom_call.1} parent=1 // pred_fallthru
      _
    // Predicated region
    $region56: #{tpu_custom_call.1} parent=1 // pred_check
      _
    $region57: #{tpu_custom_call.1} parent=1 // pred_check_branch
      %125 = sbr.rel (0) target = $region59
    $region58: #{tpu_custom_call.1} parent=1 // pred_region
      %126 = vsyncadd [#allocation4], 16
    $region59: #{tpu_custom_call.1} parent=1 // pred_fallthru
      _
    %s127 = scalar_lea.vmem %s4, %s70
    %s128 = scalar_lea.sflag [#allocation4], 2
    %p130 = scmp.lt.u32.totalorder 1, 8
    %p131 = pneg %p130
    // Predicated region
    $region60: #{tpu_custom_call.1} parent=1 // pred_check
      _
    $region61: #{tpu_custom_call.1} parent=1 // pred_check_branch
      %133 = sbr.rel (%p130) target = $region63
    $region62: #{tpu_custom_call.1} parent=1 // pred_region
      %s149 = sand.u32 1, 7
      %p150 = scmp.eq.s32.totalorder %s149, 0
      %p151 = pneg %p150
      // Predicated region
      $region75: #{tpu_custom_call.1} parent=62 // pred_check
        _
      $region76: #{tpu_custom_call.1} parent=62 // pred_check_branch
        %153 = sbr.rel (%p150) target = $region78
      $region77: #{tpu_custom_call.1} parent=62 // pred_region
        %s154 = sand.u32 1, 7
        %s155 = ssub.s32 1, %s154
        %s156 = scalar_lea.vmem %s127, %s155
        %s157 = ssub.s32 1, %s154
        %s158 = scalar_lea.vmem [#allocation3], %s157
        %s159 = sshll.u32 1, %s154
        %s160 = ssub.s32 %s159, 1
        loop: start=0, step=1, limit=1
        $region79: #{tpu_custom_call.1} parent=77 // loop_pre_header
          _
        $region80: #{tpu_custom_call.1} parent=77 // loop_header
          %s162 = sphi 0, %s166
          %p163 = scmp.ge.s32.totalorder %s162, 1
          %s167 = sphi %s156, %s156
          %s168 = sphi %s158, %s158
        $region81: #{tpu_custom_call.1} parent=77 // loop_header_branch
          %165 = sbr.rel (%p163) target = $region85
        $region82: #{tpu_custom_call.1} parent=77 // loop_body
          %v169 = vld [vmem:[%s167] sm:%s160]
          %170 = vst [vmem:[%s168] sm:%s160] %v169
        $region83: #{tpu_custom_call.1} parent=77 // loop_footer
          %s166 = sadd.s32 1, %s162
        $region84: #{tpu_custom_call.1} parent=77 // loop_footer_branch
          %161 = sbr.rel target = $region80
        $region85: #{tpu_custom_call.1} parent=77 // loop_exit
          _
      $region78: #{tpu_custom_call.1} parent=62 // pred_fallthru
        _
    $region63: #{tpu_custom_call.1} parent=1 // pred_fallthru
      _
    // Predicated region
    $region64: #{tpu_custom_call.1} parent=1 // pred_check
      %p134 = pneg %p130
    $region65: #{tpu_custom_call.1} parent=1 // pred_check_branch
      %136 = sbr.rel (%p134) target = $region67
    $region66: #{tpu_custom_call.1} parent=1 // pred_region
      %s137 = sshll.u32 1, 1
      %s138 = ssub.s32 %s137, 1
      loop: start=0, step=1, limit=1
      $region68: #{tpu_custom_call.1} parent=66 // loop_pre_header
        _
      $region69: #{tpu_custom_call.1} parent=66 // loop_header
        %s140 = sphi 0, %s144
        %p141 = scmp.ge.s32.totalorder %s140, 1
        %s145 = sphi %s127, %s127
        %s146 = sphi [#allocation3], [#allocation3]
      $region70: #{tpu_custom_call.1} parent=66 // loop_header_branch
        %143 = sbr.rel (%p141) target = $region74
      $region71: #{tpu_custom_call.1} parent=66 // loop_body
        %v147 = vld [vmem:[%s145] sm:%s138]
        %148 = vst [vmem:[%s146] sm:%s138] %v147
      $region72: #{tpu_custom_call.1} parent=66 // loop_footer
        %s144 = sadd.s32 1, %s140
      $region73: #{tpu_custom_call.1} parent=66 // loop_footer_branch
        %139 = sbr.rel target = $region69
      $region74: #{tpu_custom_call.1} parent=66 // loop_exit
        _
    $region67: #{tpu_custom_call.1} parent=1 // pred_fallthru
      _
    // Predicated region
    $region86: #{tpu_custom_call.1} parent=1 // pred_check
      _
    $region87: #{tpu_custom_call.1} parent=1 // pred_check_branch
      %173 = sbr.rel (0) target = $region89
    $region88: #{tpu_custom_call.1} parent=1 // pred_region
      %174 = vsyncadd %s128, 16
    $region89: #{tpu_custom_call.1} parent=1 // pred_fallthru
      _
    %s175 = scalar_lea.vmem %s3, %s65
    %s176 = scalar_lea.vmem [#allocation2], 1
    %s177 = scalar_lea.sflag [#allocation4], 1
    %p179 = scmp.lt.u32.totalorder 1, 8
    %p180 = pneg %p179
    // Predicated region
    $region90: #{tpu_custom_call.1} parent=1 // pred_check
      _
    $region91: #{tpu_custom_call.1} parent=1 // pred_check_branch
      %182 = sbr.rel (%p179) target = $region93
    $region92: #{tpu_custom_call.1} parent=1 // pred_region
      %s198 = sand.u32 1, 7
      %p199 = scmp.eq.s32.totalorder %s198, 0
      %p200 = pneg %p199
      // Predicated region
      $region105: #{tpu_custom_call.1} parent=92 // pred_check
        _
      $region106: #{tpu_custom_call.1} parent=92 // pred_check_branch
        %202 = sbr.rel (%p199) target = $region108
      $region107: #{tpu_custom_call.1} parent=92 // pred_region
        %s203 = sand.u32 1, 7
        %s204 = ssub.s32 1, %s203
        %s205 = scalar_lea.vmem %s175, %s204
        %s206 = ssub.s32 1, %s203
        %s207 = scalar_lea.vmem %s176, %s206 [#allocation2]
        %s208 = sshll.u32 1, %s203
        %s209 = ssub.s32 %s208, 1
        loop: start=0, step=1, limit=1
        $region109: #{tpu_custom_call.1} parent=107 // loop_pre_header
          _
        $region110: #{tpu_custom_call.1} parent=107 // loop_header
          %s211 = sphi 0, %s215
          %p212 = scmp.ge.s32.totalorder %s211, 1
          %s216 = sphi %s205, %s205
          %s217 = sphi %s207, %s207
        $region111: #{tpu_custom_call.1} parent=107 // loop_header_branch
          %214 = sbr.rel (%p212) target = $region115
        $region112: #{tpu_custom_call.1} parent=107 // loop_body
          %v218 = vld [vmem:[%s216] sm:%s209]
          %219 = vst [vmem:[%s217] sm:%s209] %v218
        $region113: #{tpu_custom_call.1} parent=107 // loop_footer
          %s215 = sadd.s32 1, %s211
        $region114: #{tpu_custom_call.1} parent=107 // loop_footer_branch
          %210 = sbr.rel target = $region110
        $region115: #{tpu_custom_call.1} parent=107 // loop_exit
          _
      $region108: #{tpu_custom_call.1} parent=92 // pred_fallthru
        _
    $region93: #{tpu_custom_call.1} parent=1 // pred_fallthru
      _
    // Predicated region
    $region94: #{tpu_custom_call.1} parent=1 // pred_check
      %p183 = pneg %p179
    $region95: #{tpu_custom_call.1} parent=1 // pred_check_branch
      %185 = sbr.rel (%p183) target = $region97
    $region96: #{tpu_custom_call.1} parent=1 // pred_region
      %s186 = sshll.u32 1, 1
      %s187 = ssub.s32 %s186, 1
      loop: start=0, step=1, limit=1
      $region98: #{tpu_custom_call.1} parent=96 // loop_pre_header
        _
      $region99: #{tpu_custom_call.1} parent=96 // loop_header
        %s189 = sphi 0, %s193
        %p190 = scmp.ge.s32.totalorder %s189, 1
        %s194 = sphi %s175, %s175
        %s195 = sphi %s176, %s176
      $region100: #{tpu_custom_call.1} parent=96 // loop_header_branch
        %192 = sbr.rel (%p190) target = $region104
      $region101: #{tpu_custom_call.1} parent=96 // loop_body
        %v196 = vld [vmem:[%s194] sm:%s187]
        %197 = vst [vmem:[%s195] sm:%s187] %v196
      $region102: #{tpu_custom_call.1} parent=96 // loop_footer
        %s193 = sadd.s32 1, %s189
      $region103: #{tpu_custom_call.1} parent=96 // loop_footer_branch
        %188 = sbr.rel target = $region99
      $region104: #{tpu_custom_call.1} parent=96 // loop_exit
        _
    $region97: #{tpu_custom_call.1} parent=1 // pred_fallthru
      _
    // Predicated region
    $region116: #{tpu_custom_call.1} parent=1 // pred_check
      _
    $region117: #{tpu_custom_call.1} parent=1 // pred_check_branch
      %222 = sbr.rel (0) target = $region119
    $region118: #{tpu_custom_call.1} parent=1 // pred_region
      %223 = vsyncadd %s177, 16
    $region119: #{tpu_custom_call.1} parent=1 // pred_fallthru
      _
    %s224 = scalar_lea.vmem %s4, %s75
    %s225 = scalar_lea.vmem [#allocation3], 1
    %s226 = scalar_lea.sflag [#allocation4], 3
    %p228 = scmp.lt.u32.totalorder 1, 8
    %p229 = pneg %p228
    // Predicated region
    $region120: #{tpu_custom_call.1} parent=1 // pred_check
      _
    $region121: #{tpu_custom_call.1} parent=1 // pred_check_branch
      %231 = sbr.rel (%p228) target = $region123
    $region122: #{tpu_custom_call.1} parent=1 // pred_region
      %s247 = sand.u32 1, 7
      %p248 = scmp.eq.s32.totalorder %s247, 0
      %p249 = pneg %p248
      // Predicated region
      $region135: #{tpu_custom_call.1} parent=122 // pred_check
        _
      $region136: #{tpu_custom_call.1} parent=122 // pred_check_branch
        %251 = sbr.rel (%p248) target = $region138
      $region137: #{tpu_custom_call.1} parent=122 // pred_region
        %s252 = sand.u32 1, 7
        %s253 = ssub.s32 1, %s252
        %s254 = scalar_lea.vmem %s224, %s253
        %s255 = ssub.s32 1, %s252
        %s256 = scalar_lea.vmem %s225, %s255 [#allocation3]
        %s257 = sshll.u32 1, %s252
        %s258 = ssub.s32 %s257, 1
        loop: start=0, step=1, limit=1
        $region139: #{tpu_custom_call.1} parent=137 // loop_pre_header
          _
        $region140: #{tpu_custom_call.1} parent=137 // loop_header
          %s260 = sphi 0, %s264
          %p261 = scmp.ge.s32.totalorder %s260, 1
          %s265 = sphi %s254, %s254
          %s266 = sphi %s256, %s256
        $region141: #{tpu_custom_call.1} parent=137 // loop_header_branch
          %263 = sbr.rel (%p261) target = $region145
        $region142: #{tpu_custom_call.1} parent=137 // loop_body
          %v267 = vld [vmem:[%s265] sm:%s258]
          %268 = vst [vmem:[%s266] sm:%s258] %v267
        $region143: #{tpu_custom_call.1} parent=137 // loop_footer
          %s264 = sadd.s32 1, %s260
        $region144: #{tpu_custom_call.1} parent=137 // loop_footer_branch
          %259 = sbr.rel target = $region140
        $region145: #{tpu_custom_call.1} parent=137 // loop_exit
          _
      $region138: #{tpu_custom_call.1} parent=122 // pred_fallthru
        _
    $region123: #{tpu_custom_call.1} parent=1 // pred_fallthru
      _
    // Predicated region
    $region124: #{tpu_custom_call.1} parent=1 // pred_check
      %p232 = pneg %p228
    $region125: #{tpu_custom_call.1} parent=1 // pred_check_branch
      %234 = sbr.rel (%p232) target = $region127
    $region126: #{tpu_custom_call.1} parent=1 // pred_region
      %s235 = sshll.u32 1, 1
      %s236 = ssub.s32 %s235, 1
      loop: start=0, step=1, limit=1
      $region128: #{tpu_custom_call.1} parent=126 // loop_pre_header
        _
      $region129: #{tpu_custom_call.1} parent=126 // loop_header
        %s238 = sphi 0, %s242
        %p239 = scmp.ge.s32.totalorder %s238, 1
        %s243 = sphi %s224, %s224
        %s244 = sphi %s225, %s225
      $region130: #{tpu_custom_call.1} parent=126 // loop_header_branch
        %241 = sbr.rel (%p239) target = $region134
      $region131: #{tpu_custom_call.1} parent=126 // loop_body
        %v245 = vld [vmem:[%s243] sm:%s236]
        %246 = vst [vmem:[%s244] sm:%s236] %v245
      $region132: #{tpu_custom_call.1} parent=126 // loop_footer
        %s242 = sadd.s32 1, %s238
      $region133: #{tpu_custom_call.1} parent=126 // loop_footer_branch
        %237 = sbr.rel target = $region129
      $region134: #{tpu_custom_call.1} parent=126 // loop_exit
        _
    $region127: #{tpu_custom_call.1} parent=1 // pred_fallthru
      _
    // Predicated region
    $region146: #{tpu_custom_call.1} parent=1 // pred_check
      _
    $region147: #{tpu_custom_call.1} parent=1 // pred_check_branch
      %271 = sbr.rel (0) target = $region149
    $region148: #{tpu_custom_call.1} parent=1 // pred_region
      %272 = vsyncadd %s226, 16
    $region149: #{tpu_custom_call.1} parent=1 // pred_fallthru
      _
    %s273 = smul.u32 1, 1
    %s274 = sshll.u32 %s273, 4
    %275 = dma.done [#allocation4], %s274
    %s276 = sshll.u32 %s273, 4
    %277 = dma.done %s128, %s276
    %s278 = sshll.u32 %s273, 4
    %279 = dma.done %s177, %s278
    %s280 = sshll.u32 %s273, 4
    %281 = dma.done %s226, %s280
    %v282 = vlaneseq
    %v283 = vshrl.u32 %v282, 7
    %vm284 = vcmp.eq.s32.totalorder %v283, 0
    %v285 = vstv %s77
    %v286 = vsel %vm284, %v285, 0.0
    %vm287 = vcmp.eq.s32.totalorder %v283, 1
    %v288 = vstv %s79
    %v289 = vsel %vm287, %v288, %v286
    %v290 = vld [vmem:[#allocation2] sm:$0xff]
    %v291 = vmul.f32 %v290, %v289
    %v292 = vtanh.pop %v291
    %v293 = vld [vmem:[#allocation3] sm:$0xff]
    %295 = vrot.lane.b32.xlu0 %v293, 32
    %v296 = vpop.permute.xlu0 %295
    %vm298 = vcmask 261120
    %v299 = vsel %vm298, %v292, %v296
    %vm300 = vcmask 351232
    %v301 = vsel %vm300, %v299, 1.0
    %v302 = vld [vmem:[%s5] sm:$0xff]
    %v303 = vld [vmem:[%s5 + $0x8] sm:$0xff]
    %v304 = vld [vmem:[%s5 + $0x10] sm:$0xff]
    %v305 = vld [vmem:[%s5 + $0x18] sm:$0xff]
    %v306 = vld [vmem:[%s5 + $0x20] sm:$0xff]
    %v307 = vld [vmem:[%s5 + $0x28] sm:$0xf]
    %vm308 = vcmask 359424
    %v310 = vsel %vm308, %v301, 0
    %vm312 = vcmask 1043456
    %v314 = vsel %vm312, %v307, 0
    %316 = vmatprep.subr.mxu0 0.0
    %317 = vmatpush1.msra.mxu0 0.0
    %318 = vmatprep.subr.mxu0 0.0
    %319 = vmatpush1.msra.mxu0 0.0
    %320 = vmatprep.subr.mxu0 0.0
    %321 = vmatpush1.msra.mxu0 0.0
    %322 = vmatprep.subr.mxu0 0.0
    %323 = vmatpush1.msra.mxu0 0.0
    %324 = vmatprep.subr.mxu0 0.0
    %325 = vmatpush1.msra.mxu0 0.0
    %326 = vmatprep.subr.mxu0 0.0
    %327 = vmatpush1.msra.mxu0 0.0
    %328 = vmatprep.subr.mxu0 0.0
    %329 = vmatpush1.msra.mxu0 0.0
    %330 = vmatprep.subr.mxu0 0.0
    %331 = vmatpush1.msra.mxu0 0.0
    %332 = vmatprep.subr.mxu0 0.0
    %333 = vmatpush1.msra.mxu0 0.0
    %334 = vmatprep.subr.mxu0 0.0
    %335 = vmatpush1.msra.mxu0 0.0
    %336 = vmatprep.subr.mxu0 0.0
    %337 = vmatpush1.msra.mxu0 %v314
    %338 = vmatprep.subr.mxu0 0.0
    %339 = vmatpush1.msra.mxu0 %v306
    %340 = vmatprep.subr.mxu0 0.0
    %341 = vmatpush1.msra.mxu0 %v305
    %342 = vmatprep.subr.mxu0 0.0
    %343 = vmatpush1.msra.mxu0 %v304
    %344 = vmatprep.subr.mxu0 0.0
    %345 = vmatpush1.msra.mxu0 %v303
    %346 = vmatprep.subr.mxu0 0.0
    %347 = vmatpush1.msra.mxu0 %v302
    %348 = vmatprep.subr.mxu0 0.0
    %349 = vmatpush2.msra.mxu0 0.0
    %350 = vmatprep.subr.mxu0 0.0
    %351 = vmatpush2.msra.mxu0 0.0
    %352 = vmatprep.subr.mxu0 0.0
    %353 = vmatpush2.msra.mxu0 0.0
    %354 = vmatprep.subr.mxu0 0.0
    %355 = vmatpush2.msra.mxu0 0.0
    %356 = vmatprep.subr.mxu0 0.0
    %357 = vmatpush2.msra.mxu0 0.0
    %358 = vmatprep.subr.mxu0 0.0
    %359 = vmatpush2.msra.mxu0 0.0
    %360 = vmatprep.subr.mxu0 0.0
    %361 = vmatpush2.msra.mxu0 0.0
    %362 = vmatprep.subr.mxu0 0.0
    %363 = vmatpush2.msra.mxu0 0.0
    %364 = vmatprep.subr.mxu0 0.0
    %365 = vmatpush2.msra.mxu0 0.0
    %366 = vmatprep.subr.mxu0 0.0
    %367 = vmatpush2.msra.mxu0 0.0
    %368 = vmatprep.subr.mxu0 0.0
    %369 = vmatpush2.msra.mxu0 0.0
    %370 = vmatprep.subr.mxu0 0.0
    %371 = vmatpush2.msra.mxu0 0.0
    %372 = vmatprep.subr.mxu0 0.0
    %373 = vmatpush2.msra.mxu0 0.0
    %374 = vmatprep.subr.mxu0 0.0
    %375 = vmatpush2.msra.mxu0 0.0
    %376 = vmatprep.subr.mxu0 0.0
    %377 = vmatpush2.msra.mxu0 0.0
    %378 = vmatprep.subr.mxu0 0.0
    %379 = vmatpush2.msra.mxu0 0.0
    %380 = vmatprep.mubr.f32.mxu0 0.0
    %381 = vmatmul.mubr.f32.gmra.mxu0 %v310
    %v382 = vpop.f32.mrf.mxu0
    %v383 = vadd.f32 0.0, %v382
    %v384 = vpop.f32.mrf.mxu0
    %385 = vdwg.mxu0
    %386 = vst [vmem:[#allocation11] sm:$0xff] %v383
    // Predicated region
    $region150: #{tpu_custom_call.1} parent=1 // pred_check
      _
    $region151: #{tpu_custom_call.1} parent=1 // pred_check_branch
      %388 = sbr.rel (0) target = $region153
    $region152: #{tpu_custom_call.1} parent=1 // pred_region
      %s390 = ssub.s32 128, 128
      %391 = vsyncadd [#allocation6], %s390
      %s393 = sshll.u32 [#allocation11], 4
      %s394 = int_to_ptr.vmem [resolvable:$true] %s393
      %396 = dma.vmem_to_hbm [thread:$0]  %s394, 128, %s6, [#allocation6]
    $region153: #{tpu_custom_call.1} parent=1 // pred_fallthru
      _
    // Predicated region
    $region154: #{tpu_custom_call.1} parent=1 // pred_check
      _
    $region155: #{tpu_custom_call.1} parent=1 // pred_check_branch
      %398 = sbr.rel (0) target = $region157
    $region156: #{tpu_custom_call.1} parent=1 // pred_region
      %399 = dma.done [#allocation6], 128
    $region157: #{tpu_custom_call.1} parent=1 // pred_fallthru
      _
    %400 = vsyncpa [#allocation6], 1
    %401 = vsyncpa [#allocation7], 1
    %402 = vsyncpa [#allocation9], 1
  %403 = vsyncmov [#allocation4]
  %s404 = vpop.sfrf %403
  %p405 = scmp.eq.s32.totalorder %s404, 0
  %p406 = pneg %p405
  %408 = shalt.err (%p406)
  %s409 = scalar_lea.sflag [#allocation4], 1
  %410 = vsyncmov %s409
  %s411 = vpop.sfrf %410
  %p412 = scmp.eq.s32.totalorder %s411, 0
  %p413 = pneg %p412
  %415 = shalt.err (%p413)
  %s416 = scalar_lea.sflag [#allocation4], 2
  %417 = vsyncmov %s416
  %s418 = vpop.sfrf %417
  %p419 = scmp.eq.s32.totalorder %s418, 0
  %p420 = pneg %p419
  %422 = shalt.err (%p420)
  %s423 = scalar_lea.sflag [#allocation4], 3
  %424 = vsyncmov %s423
  %s425 = vpop.sfrf %424
  %p426 = scmp.eq.s32.totalorder %s425, 0
  %p427 = pneg %p426
  %429 = shalt.err (%p427)

</llo_original>
